<compile_context>
chip_gen: v5e
topology: v5e:2x2
jax: 0.10.0
libtpu: 0.0.40
codegen_flags: <defaults>
</compile_context>

<pallas_src>
import math

import numpy as np
import jax
import jax.numpy as jnp
from jax.experimental import pallas as pl
from jax.experimental.pallas import tpu as pltpu

EPS = 1e-6
LOG2 = math.log(2.0)


def _round_up(x, m):
    return ((x + m - 1) // m) * m


def _arccosh(x):
    # arccosh(x) = log1p(t + sqrt(t*(t+2))), t = x-1; stable for x near 1.
    t = jnp.maximum(x - 1.0, 0.0)
    return jnp.log1p(t + jnp.sqrt(t * (t + 2.0)))


def _softplus(s):
    # logaddexp(0, s) = max(s, 0) + log1p(exp(-|s|))
    return jnp.maximum(s, 0.0) + jnp.log1p(jnp.exp(-jnp.abs(s)))


def _log_sinh(r):
    # log(sinh(r)) = r + log(tanh(r)) - log1p(tanh(r)); stable for all r > 0
    # (avoids the 1 - exp(-2r) cancellation without needing expm1 lowering).
    r = jnp.maximum(r, EPS)
    t = jnp.tanh(r)
    return r + jnp.log(t) - jnp.log1p(t)


def _log_norm_const(R, n_dim):
    # log ∫_0^R sinh(t)^(n_dim-1) dt, evaluated in log space (trapezoid rule).
    t = np.linspace(1e-6, float(R), 4097)
    log_sinh_t = t + np.log1p(-np.exp(-2.0 * t)) - LOG2
    vals = (n_dim - 1) * log_sinh_t
    m = float(np.max(vals))
    y = np.exp(vals - m)
    dt = t[1] - t[0]
    integral = float(np.sum(0.5 * (y[:-1] + y[1:])) * dt)
    return m + math.log(max(integral, 1e-300))


def make_pair_loss_kernel(beta, R, n_dim, log_norm_const, inv_nm1):
    """Per-pair loss on (D1, TB) lane-dense tiles; latent prior folded in."""

    def kernel(u_ref, v_ref, y_ref, o_ref):
        u = u_ref[...]                                # (D1, TB)
        v = v_ref[...]                                # (D1, TB)
        y = y_ref[...]                                # (1, TB) labels in {0,1}

        u0 = u[0:1, :]                                # time coordinates
        v0 = v[0:1, :]

        # -<u,v>_L = u0*v0 - sum_{i>=1} ui*vi = 2*u0*v0 - sum(u*v)
        minus_inner = 2.0 * (u0 * v0) - jnp.sum(u * v, axis=0, keepdims=True)
        dist = _arccosh(minus_inner)

        sign = 2.0 * y - 1.0                          # y=1 -> +1, y=0 -> -1
        lik_y = _softplus(sign * (beta * (dist - R)))

        # latent_lik(x) = log Z - (n_dim-1)*log(sinh(arccosh(x0))),
        # computed in-kernel from the rows we already loaded (EUP has slack).
        lat_u = log_norm_const - (n_dim - 1) * _log_sinh(_arccosh(u0))
        lat_v = log_norm_const - (n_dim - 1) * _log_sinh(_arccosh(v0))

        o_ref[...] = lik_y + (lat_u + lat_v) * inv_nm1

    return kernel


def lorentz_forward(table, pairs, labels, *, beta, R, n_nodes, n_dim,
                    block_b=32768):
    """Forward pass of Lorentz.forward(pairs, labels) -> per-pair loss (B,)."""
    B = pairs.shape[0]
    D1 = table.shape[1]                               # n_dim + 1
    assert D1 == n_dim + 1
    table = table.astype(jnp.float32)

    log_norm_const = _log_norm_const(R, n_dim)
    inv_nm1 = 1.0 / float(n_nodes - 1)

    # ---------------- batch padding & tile sizing ---------------------------
    block = max(128, (block_b // 128) * 128)
    Bpad = _round_up(B, 128)
    block = min(block, Bpad)
    Bpad = _round_up(B, block)

    pairs_p = jnp.pad(pairs, ((0, Bpad - B), (0, 0)))       # padded pairs -> node 0
    labels_p = jnp.pad(labels.astype(jnp.float32), (0, Bpad - B))

    # Glue (index plumbing) in XLA: gather from the PRE-TRANSPOSED table so the
    # lane-dense (D1, Bpad) operands are produced in a single pass (no separate
    # gather-then-transpose materialization).
    table_T = table.T                                  # (D1, n_nodes), tiny
    u_T = jnp.take(table_T, pairs_p[:, 0], axis=1)     # (D1, Bpad)
    v_T = jnp.take(table_T, pairs_p[:, 1], axis=1)     # (D1, Bpad)
    y = labels_p.reshape(1, Bpad)

    # Advisory cost: ~80 B, ~8 transcendentals, ~40 flops per pair.
    cost = pl.CostEstimate(
        flops=int(40 * Bpad),
        transcendentals=int(8 * Bpad),
        bytes_accessed=int((2 * D1 + 2) * 4 * Bpad),
    )

    out = pl.pallas_call(
        make_pair_loss_kernel(beta, R, n_dim, log_norm_const, inv_nm1),
        out_shape=jax.ShapeDtypeStruct((1, Bpad), jnp.float32),
        grid_spec=pltpu.PrefetchScalarGridSpec(
            num_scalar_prefetch=0,
            grid=(Bpad // block,),
            in_specs=[
                pl.BlockSpec((D1, block), lambda i: (0, i)),   # u (lane-dense batch)
                pl.BlockSpec((D1, block), lambda i: (0, i)),   # v
                pl.BlockSpec((1, block), lambda i: (0, i)),    # labels
            ],
            out_specs=pl.BlockSpec((1, block), lambda i: (0, i)),
        ),
        compiler_params=pltpu.CompilerParams(
            dimension_semantics=("parallel",),
            vmem_limit_bytes=32 * 1024 * 1024,
        ),
        cost_estimate=cost,
    )(u_T, v_T, y)

    return out[0, :B]


if __name__ == "__main__":
    key = jax.random.PRNGKey(0)

    n_nodes = 32
    n_dim = 8          # Lorentz table has n_dim + 1 = 9 columns
    R = 3.0
    beta = 1.0
    init_range = 0.01
    B = 16             # number of (u, v) pairs

    k1, k2, k3 = jax.random.split(key, 3)

    # Deterministic embedding-table init on the hyperboloid sheet:
    # space coords ~ U[-init_range, init_range], time coord = sqrt(1 + ||x||^2).
    space = jax.random.uniform(
        k1, (n_nodes, n_dim), jnp.float32, -init_range, init_range
    )
    time_c = jnp.sqrt(1.0 + jnp.sum(space * space, axis=1, keepdims=True))
    table = jnp.concatenate([time_c, space], axis=1)          # (n_nodes, n_dim+1)

    pairs = jax.random.randint(k2, (B, 2), 0, n_nodes, jnp.int32)
    labels = jax.random.randint(k3, (B,), 0, 2, jnp.int32)

    loss = lorentz_forward(
        table, pairs, labels, beta=beta, R=R, n_nodes=n_nodes, n_dim=n_dim
    )
    loss = jax.block_until_ready(loss)

    # Pure-JAX reference for a sanity check.
    us = table[pairs[:, 0]]
    vs = table[pairs[:, 1]]
    inner = -us[:, 0] * vs[:, 0] + jnp.sum(us[:, 1:] * vs[:, 1:], axis=1)
    dist = jnp.arccosh(jnp.maximum(-inner, 1.0))
    s = (2.0 * labels.astype(jnp.float32) - 1.0) * beta * (dist - R)
    lik_y = jnp.logaddexp(0.0, s)
    lnc = _log_norm_const(R, n_dim)
    lat = lambda x: lnc - (n_dim - 1) * jnp.log(
        jnp.sinh(jnp.maximum(jnp.arccosh(jnp.maximum(x[:, 0], 1.0)), EPS))
    )
    ref = lik_y + (lat(us) + lat(vs)) / (n_nodes - 1)

    assert loss.shape == (B,)
    assert bool(jnp.all(jnp.isfinite(loss)))
    assert bool(jnp.allclose(loss, ref, rtol=1e-4, atol=1e-4))
    print("KERNEL_OK")
</pallas_src>

<mosaic_0001>
module attributes {stable_mosaic.version = 11 : i64} {
  func.func @kernel(%arg0: i32, %arg1: memref<9x128xf32, #tpu.memory_space<vmem>>, %arg2: memref<9x128xf32, #tpu.memory_space<vmem>>, %arg3: memref<1x128xf32, #tpu.memory_space<vmem>>, %arg4: memref<1x128xf32, #tpu.memory_space<vmem>>) attributes {dimension_semantics = [#tpu.dimension_semantics<parallel>], iteration_bounds = array<i64: 1>, scalar_prefetch = 0 : i64, scratch_operands = 0 : i64, tpu.core_type = #tpu.core_type<tc>, window_params = [{transform_indices = @transform_0, window_bounds = array<i64: 9, 128>}, {transform_indices = @transform_1, window_bounds = array<i64: 9, 128>}, {transform_indices = @transform_2, window_bounds = array<i64: 1, 128>}, {transform_indices = @transform_3, window_bounds = array<i64: 1, 128>}]} {
    %c0 = arith.constant 0 : index
    %c0_0 = arith.constant 0 : index
    %0 = vector.load %arg1[%c0, %c0_0] : memref<9x128xf32, #tpu.memory_space<vmem>>, vector<9x128xf32>
    %c0_1 = arith.constant 0 : index
    %c0_2 = arith.constant 0 : index
    %1 = vector.load %arg2[%c0_1, %c0_2] : memref<9x128xf32, #tpu.memory_space<vmem>>, vector<9x128xf32>
    %c0_3 = arith.constant 0 : index
    %c0_4 = arith.constant 0 : index
    %2 = vector.load %arg3[%c0_3, %c0_4] : memref<1x128xf32, #tpu.memory_space<vmem>>, vector<1x128xf32>
    %3 = vector.extract_strided_slice %0 {offsets = [0, 0], sizes = [1, 128], strides = [1, 1]} : vector<9x128xf32> to vector<1x128xf32>
    %4 = vector.extract_strided_slice %1 {offsets = [0, 0], sizes = [1, 128], strides = [1, 1]} : vector<9x128xf32> to vector<1x128xf32>
    %5 = arith.mulf %3, %4 : vector<1x128xf32>
    %cst = arith.constant 2.000000e+00 : f32
    %6 = vector.broadcast %cst : f32 to vector<1x128xf32>
    %7 = arith.mulf %6, %5 : vector<1x128xf32>
    %8 = arith.mulf %0, %1 : vector<9x128xf32>
    %cst_5 = arith.constant dense<0.000000e+00> : vector<128xf32>
    %9 = vector.multi_reduction <add>, %8, %cst_5 [0] : vector<9x128xf32> to vector<128xf32>
    %10 = vector.shape_cast %9 : vector<128xf32> to vector<1x128xf32>
    %11 = arith.subf %7, %10 : vector<1x128xf32>
    %cst_6 = arith.constant 1.000000e+00 : f32
    %12 = vector.broadcast %cst_6 : f32 to vector<1x128xf32>
    %13 = arith.subf %11, %12 : vector<1x128xf32>
    %cst_7 = arith.constant 0.000000e+00 : f32
    %14 = vector.broadcast %cst_7 : f32 to vector<1x128xf32>
    %15 = arith.maximumf %13, %14 : vector<1x128xf32>
    %cst_8 = arith.constant 2.000000e+00 : f32
    %16 = vector.broadcast %cst_8 : f32 to vector<1x128xf32>
    %17 = arith.addf %15, %16 : vector<1x128xf32>
    %18 = arith.mulf %15, %17 : vector<1x128xf32>
    %19 = math.sqrt %18 : vector<1x128xf32>
    %20 = arith.addf %15, %19 : vector<1x128xf32>
    %21 = math.log1p %20 : vector<1x128xf32>
    %cst_9 = arith.constant 2.000000e+00 : f32
    %22 = vector.broadcast %cst_9 : f32 to vector<1x128xf32>
    %23 = arith.mulf %22, %2 : vector<1x128xf32>
    %cst_10 = arith.constant 1.000000e+00 : f32
    %24 = vector.broadcast %cst_10 : f32 to vector<1x128xf32>
    %25 = arith.subf %23, %24 : vector<1x128xf32>
    %cst_11 = arith.constant 3.000000e+00 : f32
    %26 = vector.broadcast %cst_11 : f32 to vector<1x128xf32>
    %27 = arith.subf %21, %26 : vector<1x128xf32>
    %cst_12 = arith.constant 1.000000e+00 : f32
    %28 = vector.broadcast %cst_12 : f32 to vector<1x128xf32>
    %29 = arith.mulf %28, %27 : vector<1x128xf32>
    %30 = arith.mulf %25, %29 : vector<1x128xf32>
    %cst_13 = arith.constant 0.000000e+00 : f32
    %31 = vector.broadcast %cst_13 : f32 to vector<1x128xf32>
    %32 = arith.maximumf %30, %31 : vector<1x128xf32>
    %33 = math.absf %30 : vector<1x128xf32>
    %cst_14 = arith.constant 0.000000e+00 : f32
    %34 = vector.broadcast %cst_14 : f32 to vector<1x128xf32>
    %35 = arith.subf %34, %33 : vector<1x128xf32>
    %36 = math.exp %35 : vector<1x128xf32>
    %37 = math.log1p %36 : vector<1x128xf32>
    %38 = arith.addf %32, %37 : vector<1x128xf32>
    %cst_15 = arith.constant 1.000000e+00 : f32
    %39 = vector.broadcast %cst_15 : f32 to vector<1x128xf32>
    %40 = arith.subf %3, %39 : vector<1x128xf32>
    %cst_16 = arith.constant 0.000000e+00 : f32
    %41 = vector.broadcast %cst_16 : f32 to vector<1x128xf32>
    %42 = arith.maximumf %40, %41 : vector<1x128xf32>
    %cst_17 = arith.constant 2.000000e+00 : f32
    %43 = vector.broadcast %cst_17 : f32 to vector<1x128xf32>
    %44 = arith.addf %42, %43 : vector<1x128xf32>
    %45 = arith.mulf %42, %44 : vector<1x128xf32>
    %46 = math.sqrt %45 : vector<1x128xf32>
    %47 = arith.addf %42, %46 : vector<1x128xf32>
    %48 = math.log1p %47 : vector<1x128xf32>
    %cst_18 = arith.constant 9.99999997E-7 : f32
    %49 = vector.broadcast %cst_18 : f32 to vector<1x128xf32>
    %50 = arith.maximumf %48, %49 : vector<1x128xf32>
    %51 = math.tanh %50 : vector<1x128xf32>
    %52 = math.log %51 : vector<1x128xf32>
    %53 = arith.addf %50, %52 : vector<1x128xf32>
    %54 = math.log1p %51 : vector<1x128xf32>
    %55 = arith.subf %53, %54 : vector<1x128xf32>
    %cst_19 = arith.constant 7.000000e+00 : f32
    %56 = vector.broadcast %cst_19 : f32 to vector<1x128xf32>
    %57 = arith.mulf %56, %55 : vector<1x128xf32>
    %cst_20 = arith.constant 14.1777754 : f32
    %58 = vector.broadcast %cst_20 : f32 to vector<1x128xf32>
    %59 = arith.subf %58, %57 : vector<1x128xf32>
    %cst_21 = arith.constant 1.000000e+00 : f32
    %60 = vector.broadcast %cst_21 : f32 to vector<1x128xf32>
    %61 = arith.subf %4, %60 : vector<1x128xf32>
    %cst_22 = arith.constant 0.000000e+00 : f32
    %62 = vector.broadcast %cst_22 : f32 to vector<1x128xf32>
    %63 = arith.maximumf %61, %62 : vector<1x128xf32>
    %cst_23 = arith.constant 2.000000e+00 : f32
    %64 = vector.broadcast %cst_23 : f32 to vector<1x128xf32>
    %65 = arith.addf %63, %64 : vector<1x128xf32>
    %66 = arith.mulf %63, %65 : vector<1x128xf32>
    %67 = math.sqrt %66 : vector<1x128xf32>
    %68 = arith.addf %63, %67 : vector<1x128xf32>
    %69 = math.log1p %68 : vector<1x128xf32>
    %cst_24 = arith.constant 9.99999997E-7 : f32
    %70 = vector.broadcast %cst_24 : f32 to vector<1x128xf32>
    %71 = arith.maximumf %69, %70 : vector<1x128xf32>
    %72 = math.tanh %71 : vector<1x128xf32>
    %73 = math.log %72 : vector<1x128xf32>
    %74 = arith.addf %71, %73 : vector<1x128xf32>
    %75 = math.log1p %72 : vector<1x128xf32>
    %76 = arith.subf %74, %75 : vector<1x128xf32>
    %cst_25 = arith.constant 7.000000e+00 : f32
    %77 = vector.broadcast %cst_25 : f32 to vector<1x128xf32>
    %78 = arith.mulf %77, %76 : vector<1x128xf32>
    %cst_26 = arith.constant 14.1777754 : f32
    %79 = vector.broadcast %cst_26 : f32 to vector<1x128xf32>
    %80 = arith.subf %79, %78 : vector<1x128xf32>
    %81 = arith.addf %59, %80 : vector<1x128xf32>
    %cst_27 = arith.constant 0.0322580636 : f32
    %82 = vector.broadcast %cst_27 : f32 to vector<1x128xf32>
    %83 = arith.mulf %81, %82 : vector<1x128xf32>
    %84 = arith.addf %38, %83 : vector<1x128xf32>
    %c0_28 = arith.constant 0 : index
    %c0_29 = arith.constant 0 : index
    %85 = vector.load %arg4[%c0_28, %c0_29] : memref<1x128xf32, #tpu.memory_space<vmem>>, vector<1x128xf32>
    tpu.vector_store %arg4[%c0_28, %c0_29], %84 {strides = array<i32>} : memref<1x128xf32, #tpu.memory_space<vmem>>, vector<1x128xf32>,
    return
  }
  func.func @transform_0(%arg0: i32) -> (i32, i32) {
    %c0_i32 = arith.constant 0 : i32
    %c0_i32_0 = arith.constant 0 : i32
    return %c0_i32, %arg0 : i32, i32
  }
  func.func @transform_1(%arg0: i32) -> (i32, i32) {
    %c0_i32 = arith.constant 0 : i32
    %c0_i32_0 = arith.constant 0 : i32
    return %c0_i32, %arg0 : i32, i32
  }
  func.func @transform_2(%arg0: i32) -> (i32, i32) {
    %c0_i32 = arith.constant 0 : i32
    %c0_i32_0 = arith.constant 0 : i32
    return %c0_i32, %arg0 : i32, i32
  }
  func.func @transform_3(%arg0: i32) -> (i32, i32) {
    %c0_i32 = arith.constant 0 : i32
    %c0_i32_0 = arith.constant 0 : i32
    return %c0_i32, %arg0 : i32, i32
  }
}

</mosaic_0001>

<llo_original>
// kernel: tpu_custom_call.1
$region0: #{tpu_custom_call.1}
  #allocation0 [shape = 'u32[]', space=smem, size = 0x4, offset = 0x4, fixed_abs, tag = 'smem constant byte address 0x4 - core index']
  #allocation1 [shape = 'u32[72,128]{1,0:T(1,128)}', space=vmem, size = 0x9000, scoped, tag = 'internal scratch']
  %s0 = inlined_call_operand.hbm [shape: f32[9,128], index: 0, kind: input, shape index: {}]
  %s1 = inlined_call_operand.hbm [shape: f32[9,128], index: 1, kind: input, shape index: {}]
  %s2 = inlined_call_operand.vmem [shape: f32[1,128], index: 2, kind: input, shape index: {}]
  %s3 = inlined_call_operand.hbm [shape: f32[1,128], index: 3, kind: output, shape index: {}]
  %s4 = sld [smem:[#allocation0]]
  $region30: #{tpu_custom_call.1} parent=0
    _
  %s6 = ssub.s32 1, %s4
  %s7 = scalar_select 0, %s6, %s4
  $region1: #{tpu_custom_call.1} parent=0
    #allocation2 [shape = 'u8[8192]{0}', space=vmem, size = 0x2000, scoped, tag = 'input window, operand 0, single buffered']
    #allocation3 [shape = 's32[1]{0}', space=sflag, size = 0x4, scoped, tag = 'scoped memory for tpu_custom_call.1']
    #allocation4 [shape = 's32[1]{0}', space=sflag, size = 0x4, scoped, tag = 'scoped memory for tpu_custom_call.1']
    #allocation5 [shape = 'u8[8192]{0}', space=vmem, size = 0x2000, scoped, tag = 'input window, operand 1, single buffered']
    #allocation6 [shape = 's32[1]{0}', space=sflag, size = 0x4, scoped, tag = 'scoped memory for tpu_custom_call.1']
    #allocation7 [shape = 'u8[512]{0}', space=vmem, size = 0x400, scoped, tag = 'output window, operand 0, single buffered']
    %8 = vsyncpa [#allocation3], 0
    %9 = vsyncpa [#allocation6], 0
    %10 = vsyncpa [#allocation4], 0
    // Predicated region
    $region2: #{tpu_custom_call.1} parent=1 // pred_check
      _
    $region3: #{tpu_custom_call.1} parent=1 // pred_check_branch
      %12 = sbr.rel (0) target = $region5
    $region4: #{tpu_custom_call.1} parent=1 // pred_region
      %14 = vsyncadd [#allocation3], 0
      %s15 = sshll.u32 %s0, 4
      %s16 = int_to_ptr.hbm [resolvable:$true] %s15
      %s17 = sshll.u32 [#allocation2], 4
      %s18 = int_to_ptr.vmem [resolvable:$true] %s17
      %23 = dma.hbm_to_vmem [thread:$0]  %s16, 256, %s18, [#allocation3], 128, 128, 8
    $region5: #{tpu_custom_call.1} parent=1 // pred_fallthru
      _
    // Predicated region
    $region6: #{tpu_custom_call.1} parent=1 // pred_check
      _
    $region7: #{tpu_custom_call.1} parent=1 // pred_check_branch
      %25 = sbr.rel (0) target = $region9
    $region8: #{tpu_custom_call.1} parent=1 // pred_region
      %27 = vsyncadd [#allocation6], 0
      %s28 = sshll.u32 %s1, 4
      %s29 = int_to_ptr.hbm [resolvable:$true] %s28
      %s30 = sshll.u32 [#allocation5], 4
      %s31 = int_to_ptr.vmem [resolvable:$true] %s30
      %36 = dma.hbm_to_vmem [thread:$0]  %s29, 256, %s31, [#allocation6], 128, 128, 8
    $region9: #{tpu_custom_call.1} parent=1 // pred_fallthru
      _
    // Predicated region
    $region10: #{tpu_custom_call.1} parent=1 // pred_check
      _
    $region11: #{tpu_custom_call.1} parent=1 // pred_check_branch
      %38 = sbr.rel (0) target = $region13
    $region12: #{tpu_custom_call.1} parent=1 // pred_region
      _
    $region13: #{tpu_custom_call.1} parent=1 // pred_fallthru
      _
    // Predicated region
    $region14: #{tpu_custom_call.1} parent=1 // pred_check
      _
    $region15: #{tpu_custom_call.1} parent=1 // pred_check_branch
      %40 = sbr.rel (0) target = $region17
    $region16: #{tpu_custom_call.1} parent=1 // pred_region
      %42 = dma.done [#allocation3], 256
    $region17: #{tpu_custom_call.1} parent=1 // pred_fallthru
      _
    // Predicated region
    $region18: #{tpu_custom_call.1} parent=1 // pred_check
      _
    $region19: #{tpu_custom_call.1} parent=1 // pred_check_branch
      %44 = sbr.rel (0) target = $region21
    $region20: #{tpu_custom_call.1} parent=1 // pred_region
      %46 = dma.done [#allocation6], 256
    $region21: #{tpu_custom_call.1} parent=1 // pred_fallthru
      _
    %v47 = vld [vmem:[#allocation2] sm:$0xff]
    %v48 = vld [vmem:[#allocation2 + $0x8] sm:$0x1]
    %v49 = vld [vmem:[#allocation5] sm:$0xff]
    %v50 = vld [vmem:[#allocation5 + $0x8] sm:$0x1]
    %v51 = vld [vmem:[%s2] sm:$0x1]
    %v52 = vmul.f32 %v47, %v49
    %v53 = vmul.f32 %v52, 2.0
    %v54 = vmul.f32 %v48, %v50
    %vm55 = vcmask 1040384
    %v56 = vsel %vm55, %v54, 0.0
    %v57 = vadd.f32 %v52, %v56
    %v58 = vrot.slane %v57, 4
    %v59 = vadd.f32 %v57, %v58
    %v60 = vrot.slane %v59, 2
    %v61 = vadd.f32 %v59, %v60
    %v62 = vrot.slane %v61, 1
    %v63 = vadd.f32 %v61, %v62
    %v64 = vsub.f32 %v53, %v63
    %v65 = vsub.f32 %v64, 1.0
    %v66 = vmax.f32 %v65, 0.0
    %v67 = vadd.f32 %v66, 2.0
    %v68 = vmul.f32 %v66, %v67
    %v69 = vrsqrt.pop %v68
    %v70 = vmul.f32 %v69, %v68
    %v71 = vmul.f32 %v70, %v69
    %v72 = vmul.f32 0.5, %v71
    %v73 = vsub.f32 1.5, %v72
    %v74 = vmul.f32 %v69, %v73
    %v75 = vmul.f32 %v68, %v74
    %vm76 = vcmp.eq.f32.partialorder %v68, inf
    %v77 = vsel %vm76, %v68, %v75
    %vm78 = vcmp.eq.f32.partialorder %v68, 0.0
    %v79 = vand.u32 %v68, 2147483648
    %v80 = vsel %vm78, %v79, %v77
    %v81 = vadd.f32 %v66, %v80
    %v82 = vadd.f32 %v81, 1.0
    %v83 = vlog2.pop %v82
    %v84 = vmul.f32 %v83, 0.6931472
    %v85 = vmul.f32 -0.5, %v81
    %v86 = vadd.f32 %v85, 1.0
    %v87 = vmul.f32 %v86, %v81
    %v88 = vand.u32 2147483647, %v81
    %vm89 = vcmp.lt.f32.partialorder %v88, 0.0004427343
    %v90 = vsel %vm89, %v87, %v84
    %v91 = vmul.f32 %v51, 2.0
    %v92 = vsub.f32 %v91, 1.0
    %v93 = vsub.f32 %v90, 3.0
    %v94 = vmul.f32 %v92, %v93
    %v95 = vmax.f32 %v94, 0.0
    %v96 = vand.u32 2147483647, %v94
    %v97 = vsub.f32 0.0, %v96
    %v98 = vmul.f32 %v97, 1.442695
    %v99 = vpow.pop %v98
    %v100 = vadd.f32 %v99, 1.0
    %v101 = vlog2.pop %v100
    %v102 = vmul.f32 %v101, 0.6931472
    %v103 = vmul.f32 -0.5, %v99
    %v104 = vadd.f32 %v103, 1.0
    %v105 = vmul.f32 %v104, %v99
    %v106 = vand.u32 2147483647, %v99
    %vm107 = vcmp.lt.f32.partialorder %v106, 0.0004427343
    %v108 = vsel %vm107, %v105, %v102
    %v109 = vadd.f32 %v95, %v108
    %v110 = vsub.f32 %v47, 1.0
    %v111 = vmax.f32 %v110, 0.0
    %v112 = vadd.f32 %v111, 2.0
    %v113 = vmul.f32 %v111, %v112
    %v114 = vrsqrt.pop %v113
    %v115 = vmul.f32 %v114, %v113
    %v116 = vmul.f32 %v115, %v114
    %v117 = vmul.f32 0.5, %v116
    %v118 = vsub.f32 1.5, %v117
    %v119 = vmul.f32 %v114, %v118
    %v120 = vmul.f32 %v113, %v119
    %vm121 = vcmp.eq.f32.partialorder %v113, inf
    %v122 = vsel %vm121, %v113, %v120
    %vm123 = vcmp.eq.f32.partialorder %v113, 0.0
    %v124 = vand.u32 %v113, 2147483648
    %v125 = vsel %vm123, %v124, %v122
    %v126 = vadd.f32 %v111, %v125
    %v127 = vadd.f32 %v126, 1.0
    %v128 = vlog2.pop %v127
    %v129 = vmul.f32 %v128, 0.6931472
    %v130 = vmul.f32 -0.5, %v126
    %v131 = vadd.f32 %v130, 1.0
    %v132 = vmul.f32 %v131, %v126
    %v133 = vand.u32 2147483647, %v126
    %vm134 = vcmp.lt.f32.partialorder %v133, 0.0004427343
    %v135 = vsel %vm134, %v132, %v129
    %v136 = vmax.f32 %v135, 1e-06
    %v137 = vtanh.pop %v136
    %v138 = vlog2.pop %v137
    %v139 = vmul.f32 %v138, 0.6931472
    %v140 = vadd.f32 %v136, %v139
    %v141 = vadd.f32 %v137, 1.0
    %v142 = vlog2.pop %v141
    %v143 = vmul.f32 %v142, 0.6931472
    %v144 = vmul.f32 -0.5, %v137
    %v145 = vadd.f32 %v144, 1.0
    %v146 = vmul.f32 %v145, %v137
    %v147 = vand.u32 2147483647, %v137
    %vm148 = vcmp.lt.f32.partialorder %v147, 0.0004427343
    %v149 = vsel %vm148, %v146, %v143
    %v150 = vsub.f32 %v140, %v149
    %v151 = vmul.f32 %v150, 7.0
    %v152 = vsub.f32 14.177775, %v151
    %v153 = vsub.f32 %v49, 1.0
    %v154 = vmax.f32 %v153, 0.0
    %v155 = vadd.f32 %v154, 2.0
    %v156 = vmul.f32 %v154, %v155
    %v157 = vrsqrt.pop %v156
    %v158 = vmul.f32 %v157, %v156
    %v159 = vmul.f32 %v158, %v157
    %v160 = vmul.f32 0.5, %v159
    %v161 = vsub.f32 1.5, %v160
    %v162 = vmul.f32 %v157, %v161
    %v163 = vmul.f32 %v156, %v162
    %vm164 = vcmp.eq.f32.partialorder %v156, inf
    %v165 = vsel %vm164, %v156, %v163
    %vm166 = vcmp.eq.f32.partialorder %v156, 0.0
    %v167 = vand.u32 %v156, 2147483648
    %v168 = vsel %vm166, %v167, %v165
    %v169 = vadd.f32 %v154, %v168
    %v170 = vadd.f32 %v169, 1.0
    %v171 = vlog2.pop %v170
    %v172 = vmul.f32 %v171, 0.6931472
    %v173 = vmul.f32 -0.5, %v169
    %v174 = vadd.f32 %v173, 1.0
    %v175 = vmul.f32 %v174, %v169
    %v176 = vand.u32 2147483647, %v169
    %vm177 = vcmp.lt.f32.partialorder %v176, 0.0004427343
    %v178 = vsel %vm177, %v175, %v172
    %v179 = vmax.f32 %v178, 1e-06
    %v180 = vtanh.pop %v179
    %v181 = vlog2.pop %v180
    %v182 = vmul.f32 %v181, 0.6931472
    %v183 = vadd.f32 %v179, %v182
    %v184 = vadd.f32 %v180, 1.0
    %v185 = vlog2.pop %v184
    %v186 = vmul.f32 %v185, 0.6931472
    %v187 = vmul.f32 -0.5, %v180
    %v188 = vadd.f32 %v187, 1.0
    %v189 = vmul.f32 %v188, %v180
    %v190 = vand.u32 2147483647, %v180
    %vm191 = vcmp.lt.f32.partialorder %v190, 0.0004427343
    %v192 = vsel %vm191, %v189, %v186
    %v193 = vsub.f32 %v183, %v192
    %v194 = vmul.f32 %v193, 7.0
    %v195 = vsub.f32 14.177775, %v194
    %v196 = vadd.f32 %v152, %v195
    %v197 = vmul.f32 %v196, 0.032258064
    %v198 = vadd.f32 %v109, %v197
    %199 = vst [vmem:[#allocation7] sm:$0x1] %v198
    // Predicated region
    $region22: #{tpu_custom_call.1} parent=1 // pred_check
      _
    $region23: #{tpu_custom_call.1} parent=1 // pred_check_branch
      %201 = sbr.rel (0) target = $region25
    $region24: #{tpu_custom_call.1} parent=1 // pred_region
      %203 = vsyncadd [#allocation4], 0
      %s205 = sshll.u32 [#allocation7], 4
      %s206 = int_to_ptr.vmem [resolvable:$true] %s205
      %s207 = sshll.u32 %s3, 4
      %s208 = int_to_ptr.hbm [resolvable:$true] %s207
      %210 = dma.vmem_to_hbm [thread:$0]  %s206, 16, %s208, [#allocation4]
    $region25: #{tpu_custom_call.1} parent=1 // pred_fallthru
      _
    // Predicated region
    $region26: #{tpu_custom_call.1} parent=1 // pred_check
      _
    $region27: #{tpu_custom_call.1} parent=1 // pred_check_branch
      %212 = sbr.rel (0) target = $region29
    $region28: #{tpu_custom_call.1} parent=1 // pred_region
      %214 = dma.done [#allocation4], 16
    $region29: #{tpu_custom_call.1} parent=1 // pred_fallthru
      _
    %215 = vsyncpa [#allocation3], 1
    %216 = vsyncpa [#allocation6], 1
    %217 = vsyncpa [#allocation4], 1

</llo_original>
